<compile_context>
chip_gen: v6e
topology: v6e:2x2x1
jax: 0.10.0
libtpu: 0.0.40
codegen_flags: <defaults>
</compile_context>

<pallas_src>
import jax
import jax.numpy as jnp
from jax.experimental import pallas as pl
from jax.experimental.pallas import tpu as pltpu


def _round_up(x, m):
    return ((x + m - 1) // m) * m


def critic_kernel(x_ref, w_ref, b_ref, wq_ref, bq_ref, q_ref):
    # Hidden layer: one MXU matmul over the concatenated (s||a) input.
    h = jnp.dot(x_ref[...], w_ref[...], preferred_element_type=jnp.float32)
    h = jnp.maximum(h + b_ref[...], 0.0)                     # bias + relu (VPU)
    # Output layer (hidden -> 1): VPU multiply + lane reduce, no second MXU matmul.
    q = jnp.sum(h * wq_ref[...], axis=-1, keepdims=True) + bq_ref[0, 0]
    q_ref[...] = q.astype(q_ref.dtype)


def critic_forward(s, a, packed, *, max_tile_b=1024):
    """packed: dict from pack_params(). Returns q of shape (B, 1) float32."""
    w, b, wq_row, bq = packed["w"], packed["b"], packed["wq_row"], packed["bq"]
    K, H = w.shape                                            # K = s_space + a_space, H = padded hidden
    B = s.shape[0]

    # Fuse inputs: x = [s || a]  (B, K)
    x = jnp.concatenate([s.astype(jnp.float32), a.astype(jnp.float32)], axis=1)

    # Batch tiling: tile must be a multiple of 8 (sublane); pad B up to a tile multiple.
    tile_b = min(max_tile_b, _round_up(B, 8))
    b_pad = _round_up(B, tile_b)
    if b_pad != B:
        x = jnp.pad(x, ((0, b_pad - B), (0, 0)))

    grid = (b_pad // tile_b,)

    q = pl.pallas_call(
        critic_kernel,
        out_shape=jax.ShapeDtypeStruct((b_pad, 1), jnp.float32),
        grid=grid,
        in_specs=[
            pl.BlockSpec((tile_b, K), lambda i: (i, 0)),           # x: pipelined over batch
            pl.BlockSpec((K, H), lambda i: (0, 0)),                # fused hidden weight (VMEM-resident)
            pl.BlockSpec((1, H), lambda i: (0, 0)),                # fused hidden bias
            pl.BlockSpec((1, H), lambda i: (0, 0)),                # output weight row
            pl.BlockSpec(memory_space=pltpu.MemorySpace.SMEM),     # bq scalar in SMEM
        ],
        out_specs=pl.BlockSpec((tile_b, 1), lambda i: (i, 0)),
        compiler_params=pltpu.CompilerParams(
            dimension_semantics=("parallel",),                     # batch axis is embarrassingly parallel
        ),
    )(x, w, b, wq_row, bq)

    return q[:B]


def init_params(key, s_space, a_space, hidden=50):
    """Deterministic init mimicking torch.nn.Linear's U(-1/sqrt(fan_in), 1/sqrt(fan_in)).
    Weights stored already transposed: (in_features, out_features)."""
    ks = jax.random.split(key, 6)

    def uniform(k, shape, fan_in):
        bound = 1.0 / jnp.sqrt(jnp.float32(fan_in))
        return jax.random.uniform(k, shape, jnp.float32, -bound, bound)

    return {
        "ws_t": uniform(ks[0], (s_space, hidden), s_space),
        "bs":   uniform(ks[1], (1, hidden), s_space),
        "wa_t": uniform(ks[2], (a_space, hidden), a_space),
        "ba":   uniform(ks[3], (1, hidden), a_space),
        "wq_t": uniform(ks[4], (hidden, 1), hidden),
        "bq":   uniform(ks[5], (1, 1), hidden),
    }


def pack_params(p, *, lane_multiple=128):
    """Fuse + pad the torch-layout params into the kernel's packed layout.
    - w      : (s_space + a_space, H_pad)   fused hidden weight
    - b      : (1, H_pad)                   fused hidden bias (bs + ba)
    - wq_row : (1, H_pad)                   output weights as a lane row
    - bq     : (1, 1)                       output bias scalar (goes to SMEM)
    Padded hidden lanes have zero weight / bias / output-weight, so they contribute 0."""
    hidden = p["ws_t"].shape[1]
    h_pad = _round_up(hidden, lane_multiple)
    pad = h_pad - hidden

    w = jnp.concatenate([p["ws_t"], p["wa_t"]], axis=0)       # (s_space + a_space, hidden)
    b = p["bs"] + p["ba"]                                     # (1, hidden)
    wq_row = p["wq_t"].T                                      # (1, hidden)
    if pad:
        w = jnp.pad(w, ((0, 0), (0, pad)))
        b = jnp.pad(b, ((0, 0), (0, pad)))
        wq_row = jnp.pad(wq_row, ((0, 0), (0, pad)))
    return {"w": w, "b": b, "wq_row": wq_row, "bq": p["bq"]}


def critic_ref(s, a, p):
    """Pure-JAX reference (un-fused, un-padded) for correctness checks."""
    phi_s = s @ p["ws_t"] + p["bs"]
    phi_a = a @ p["wa_t"] + p["ba"]
    pre_q = jnp.maximum(phi_s + phi_a, 0.0)
    return pre_q @ p["wq_t"] + p["bq"]


if __name__ == "__main__":
    key = jax.random.PRNGKey(0)
    k_s, k_a, k_p, k_s2, k_a2 = jax.random.split(key, 5)

    B, s_space, a_space = 8, 16, 4
    s = jax.random.normal(k_s, (B, s_space), jnp.float32)
    a = jax.random.normal(k_a, (B, a_space), jnp.float32)

    torch_params = init_params(k_p, s_space, a_space)
    packed = pack_params(torch_params)

    # Small-batch run (single grid step).
    q = critic_forward(s, a, packed)
    jax.block_until_ready(q)
    q_ref = critic_ref(s, a, torch_params)
    assert q.shape == (B, 1)
    assert jnp.allclose(q, q_ref, atol=1e-5, rtol=1e-5)

    # Larger, non-multiple batch to exercise tiling + padding + multi-step grid.
    B2 = 200
    s2 = jax.random.normal(k_s2, (B2, s_space), jnp.float32)
    a2 = jax.random.normal(k_a2, (B2, a_space), jnp.float32)
    q2 = critic_forward(s2, a2, packed, max_tile_b=64)
    jax.block_until_ready(q2)
    q2_ref = critic_ref(s2, a2, torch_params)
    assert q2.shape == (B2, 1)
    assert jnp.allclose(q2, q2_ref, atol=1e-5, rtol=1e-5)

    print("KERNEL_OK")
</pallas_src>

<mosaic_0001>
module attributes {stable_mosaic.version = 11 : i64} {
  func.func @critic_kernel(%arg0: i32, %arg1: memref<8x20xf32, #tpu.memory_space<vmem>>, %arg2: memref<20x128xf32, #tpu.memory_space<vmem>>, %arg3: memref<1x128xf32, #tpu.memory_space<vmem>>, %arg4: memref<1x128xf32, #tpu.memory_space<vmem>>, %arg5: memref<1x1xf32, #tpu.memory_space<smem>>, %arg6: memref<8x1xf32, #tpu.memory_space<vmem>>) attributes {dimension_semantics = [#tpu.dimension_semantics<parallel>], iteration_bounds = array<i64: 1>, scalar_prefetch = 0 : i64, scratch_operands = 0 : i64, tpu.core_type = #tpu.core_type<tc>, window_params = [{transform_indices = @transform_0, window_bounds = array<i64: 8, 20>}, {pipeline_mode = #tpu.pipeline_mode<synchronous>, transform_indices = @transform_1, window_bounds = array<i64: 20, 128>}, {pipeline_mode = #tpu.pipeline_mode<synchronous>, transform_indices = @transform_2, window_bounds = array<i64: 1, 128>}, {pipeline_mode = #tpu.pipeline_mode<synchronous>, transform_indices = @transform_3, window_bounds = array<i64: 1, 128>}, {transform_indices = @transform_4, window_bounds = array<i64: 1, 1>}, {transform_indices = @transform_5, window_bounds = array<i64: 8, 1>}]} {
    %c0 = arith.constant 0 : index
    %c0_0 = arith.constant 0 : index
    %0 = vector.load %arg1[%c0, %c0_0] : memref<8x20xf32, #tpu.memory_space<vmem>>, vector<8x20xf32>
    %c0_1 = arith.constant 0 : index
    %c0_2 = arith.constant 0 : index
    %1 = vector.load %arg2[%c0_1, %c0_2] : memref<20x128xf32, #tpu.memory_space<vmem>>, vector<20x128xf32>
    %cst = arith.constant dense<0.000000e+00> : vector<8x128xf32>
    %2 = tpu.matmul %0, %1, %cst {dimension_numbers = #tpu.dot_dimension_numbers<[1], [0], [0], [1], [0, 0, 1, 1], [], []>} : vector<8x20xf32>, vector<20x128xf32>, vector<8x128xf32> -> vector<8x128xf32>
    %c0_3 = arith.constant 0 : index
    %c0_4 = arith.constant 0 : index
    %3 = vector.load %arg3[%c0_3, %c0_4] : memref<1x128xf32, #tpu.memory_space<vmem>>, vector<1x128xf32>
    %4 = vector.broadcast %3 : vector<1x128xf32> to vector<8x128xf32>
    %5 = arith.addf %2, %4 : vector<8x128xf32>
    %cst_5 = arith.constant 0.000000e+00 : f32
    %6 = vector.broadcast %cst_5 : f32 to vector<8x128xf32>
    %7 = arith.maximumf %5, %6 : vector<8x128xf32>
    %c0_6 = arith.constant 0 : index
    %c0_7 = arith.constant 0 : index
    %8 = vector.load %arg4[%c0_6, %c0_7] : memref<1x128xf32, #tpu.memory_space<vmem>>, vector<1x128xf32>
    %9 = vector.broadcast %8 : vector<1x128xf32> to vector<8x128xf32>
    %10 = arith.mulf %7, %9 : vector<8x128xf32>
    %cst_8 = arith.constant dense<0.000000e+00> : vector<8xf32>
    %11 = vector.multi_reduction <add>, %10, %cst_8 [1] : vector<8x128xf32> to vector<8xf32>
    %12 = vector.shape_cast %11 : vector<8xf32> to vector<8x1xf32>
    %c0_9 = arith.constant 0 : index
    %c0_10 = arith.constant 0 : index
    %13 = memref.load %arg5[%c0_9, %c0_10] : memref<1x1xf32, #tpu.memory_space<smem>>
    %14 = vector.broadcast %13 : f32 to vector<8x1xf32>
    %15 = arith.addf %12, %14 : vector<8x1xf32>
    %c0_11 = arith.constant 0 : index
    %c0_12 = arith.constant 0 : index
    %16 = vector.load %arg6[%c0_11, %c0_12] : memref<8x1xf32, #tpu.memory_space<vmem>>, vector<8x1xf32>
    tpu.vector_store %arg6[%c0_11, %c0_12], %15 {strides = array<i32>} : memref<8x1xf32, #tpu.memory_space<vmem>>, vector<8x1xf32>,
    return
  }
  func.func @transform_0(%arg0: i32) -> (i32, i32) {
    %c0_i32 = arith.constant 0 : i32
    %c0_i32_0 = arith.constant 0 : i32
    return %arg0, %c0_i32 : i32, i32
  }
  func.func @transform_1(%arg0: i32) -> (i32, i32) {
    %c0_i32 = arith.constant 0 : i32
    %c0_i32_0 = arith.constant 0 : i32
    %c0_i32_1 = arith.constant 0 : i32
    return %c0_i32, %c0_i32_0 : i32, i32
  }
  func.func @transform_2(%arg0: i32) -> (i32, i32) {
    %c0_i32 = arith.constant 0 : i32
    %c0_i32_0 = arith.constant 0 : i32
    %c0_i32_1 = arith.constant 0 : i32
    return %c0_i32, %c0_i32_0 : i32, i32
  }
  func.func @transform_3(%arg0: i32) -> (i32, i32) {
    %c0_i32 = arith.constant 0 : i32
    %c0_i32_0 = arith.constant 0 : i32
    %c0_i32_1 = arith.constant 0 : i32
    return %c0_i32, %c0_i32_0 : i32, i32
  }
  func.func @transform_4(%arg0: i32) -> (i32, i32) {
    %c0_i32 = arith.constant 0 : i32
    %c0_i32_0 = arith.constant 0 : i32
    %c0_i32_1 = arith.constant 0 : i32
    return %c0_i32, %c0_i32_0 : i32, i32
  }
  func.func @transform_5(%arg0: i32) -> (i32, i32) {
    %c0_i32 = arith.constant 0 : i32
    %c0_i32_0 = arith.constant 0 : i32
    return %arg0, %c0_i32 : i32, i32
  }
}

</mosaic_0001>

<llo_original>
// kernel: tpu_custom_call.1
$region0: #{tpu_custom_call.1}
  #allocation0 [shape = 'u32[]', space=smem, size = 0x4, offset = 0x4, fixed_abs, tag = 'smem constant byte address 0x4 - core index']
  #allocation1 [shape = 'u32[144,128]{1,0:T(1,128)}', space=vmem, size = 0x12000, scoped, tag = 'internal scratch']
  #allocation2 [shape = 'f32[1,1]{1,0:T(1,128)S(6)}', space=smem, size = 0x200, scoped, tag = 'scoped memory for tpu_custom_call.1']
  %s0 = inlined_call_operand.hbm [shape: f32[8,20], index: 0, kind: input, shape index: {}]
  %s1 = inlined_call_operand.hbm [shape: f32[20,128], index: 1, kind: input, shape index: {}]
  %s2 = inlined_call_operand.vmem [shape: f32[1,128], index: 2, kind: input, shape index: {}]
  %s3 = inlined_call_operand.vmem [shape: f32[1,128], index: 3, kind: input, shape index: {}]
  %s4 = inlined_call_operand.<no memory space> [shape: f32[1,1], index: 4, kind: input, shape index: {}]
  %s5 = inlined_call_operand.vmem [shape: f32[8,1], index: 5, kind: output, shape index: {}]
  %s6 = sld [smem:[#allocation0]]
  $region38: #{tpu_custom_call.1} parent=0
    _
  %s8 = ssub.s32 1, %s6
  %s9 = scalar_select 0, %s8, %s6
  %10 = sst [smem:[#allocation2]] %s4
  $region1: #{tpu_custom_call.1} parent=0
    #allocation3 [shape = 'u8[4096]{0}', space=vmem, size = 0x1000, scoped, tag = 'input window, operand 0, single buffered']
    #allocation4 [shape = 's32[1]{0}', space=sflag, size = 0x4, scoped, tag = 'scoped memory for tpu_custom_call.1']
    #allocation5 [shape = 'u8[12288]{0}', space=vmem, size = 0x3000, scoped, tag = 'input window, operand 1, single buffered']
    #allocation6 [shape = 's32[1]{0}', space=sflag, size = 0x4, scoped, tag = 'scoped memory for tpu_custom_call.1']
    %11 = vsyncpa [#allocation4], 0
    %12 = vsyncpa [#allocation6], 0
    // Predicated region
    $region2: #{tpu_custom_call.1} parent=1 // pred_check
      _
    $region3: #{tpu_custom_call.1} parent=1 // pred_check_branch
      %14 = sbr.rel (0) target = $region5
    $region4: #{tpu_custom_call.1} parent=1 // pred_region
      %s16 = ssub.s32 128, 128
      %17 = vsyncadd [#allocation4], %s16
      %s19 = sshll.u32 [#allocation3], 4
      %s20 = int_to_ptr.vmem [resolvable:$true] %s19
      %22 = dma.hbm_to_vmem [thread:$0]  %s0, 128, %s20, [#allocation4]
    $region5: #{tpu_custom_call.1} parent=1 // pred_fallthru
      _
    // Predicated region
    $region6: #{tpu_custom_call.1} parent=1 // pred_check
      _
    $region7: #{tpu_custom_call.1} parent=1 // pred_check_branch
      %24 = sbr.rel (0) target = $region9
    $region8: #{tpu_custom_call.1} parent=1 // pred_region
      %s26 = ssub.s32 384, 384
      %27 = vsyncadd [#allocation6], %s26
      %s28 = sshll.u32 [#allocation5], 4
      %s29 = int_to_ptr.vmem [resolvable:$true] %s28
      %34 = dma.hbm_to_vmem [thread:$0]  %s1, 384, %s29, [#allocation6], 128, 128, 8
    $region9: #{tpu_custom_call.1} parent=1 // pred_fallthru
      _
    // Predicated region
    $region10: #{tpu_custom_call.1} parent=1 // pred_check
      _
    $region11: #{tpu_custom_call.1} parent=1 // pred_check_branch
      %36 = sbr.rel (0) target = $region13
    $region12: #{tpu_custom_call.1} parent=1 // pred_region
      _
    $region13: #{tpu_custom_call.1} parent=1 // pred_fallthru
      _
    // Predicated region
    $region14: #{tpu_custom_call.1} parent=1 // pred_check
      _
    $region15: #{tpu_custom_call.1} parent=1 // pred_check_branch
      %38 = sbr.rel (0) target = $region17
    $region16: #{tpu_custom_call.1} parent=1 // pred_region
      _
    $region17: #{tpu_custom_call.1} parent=1 // pred_fallthru
      _
    // Predicated region
    $region18: #{tpu_custom_call.1} parent=1 // pred_check
      _
    $region19: #{tpu_custom_call.1} parent=1 // pred_check_branch
      %40 = sbr.rel (0) target = $region21
    $region20: #{tpu_custom_call.1} parent=1 // pred_region
      _
    $region21: #{tpu_custom_call.1} parent=1 // pred_fallthru
      _
    // Predicated region
    $region22: #{tpu_custom_call.1} parent=1 // pred_check
      _
    $region23: #{tpu_custom_call.1} parent=1 // pred_check_branch
      %42 = sbr.rel (0) target = $region25
    $region24: #{tpu_custom_call.1} parent=1 // pred_region
      %43 = dma.done [#allocation4], 128
    $region25: #{tpu_custom_call.1} parent=1 // pred_fallthru
      _
    // Predicated region
    $region26: #{tpu_custom_call.1} parent=1 // pred_check
      _
    $region27: #{tpu_custom_call.1} parent=1 // pred_check_branch
      %45 = sbr.rel (0) target = $region29
    $region28: #{tpu_custom_call.1} parent=1 // pred_region
      %46 = dma.done [#allocation6], 384
    $region29: #{tpu_custom_call.1} parent=1 // pred_fallthru
      _
    %v47 = vld [vmem:[#allocation3] sm:$0xff]
    %v48 = vld [vmem:[#allocation5] sm:$0xff]
    %v49 = vld [vmem:[#allocation5 + $0x8] sm:$0xff]
    %v50 = vld [vmem:[#allocation5 + $0x10] sm:$0xf]
    %v51 = vld [vmem:[%s2] sm:$0x1]
    %v53 = vlaneseq
    %v54 = vshrl.u32 %v53, 7
    %v55 = vsub.s32 0, %v54
    %v56 = vrot.slane %v51, %v55
    %vm58 = vcmask 162816
    %v60 = vsel %vm58, %v47, 0
    %vm62 = vcmask 1043456
    %v64 = vsel %vm62, %v50, 0
    %66 = vmatprep.subr.mxu0 0.0
    %67 = vmatpush1.msra.mxu0 0.0
    %68 = vmatprep.subr.mxu0 0.0
    %69 = vmatpush1.msra.mxu0 0.0
    %70 = vmatprep.subr.mxu0 0.0
    %71 = vmatpush1.msra.mxu0 0.0
    %72 = vmatprep.subr.mxu0 0.0
    %73 = vmatpush1.msra.mxu0 0.0
    %74 = vmatprep.subr.mxu0 0.0
    %75 = vmatpush1.msra.mxu0 0.0
    %76 = vmatprep.subr.mxu0 0.0
    %77 = vmatpush1.msra.mxu0 0.0
    %78 = vmatprep.subr.mxu0 0.0
    %79 = vmatpush1.msra.mxu0 0.0
    %80 = vmatprep.subr.mxu0 0.0
    %81 = vmatpush1.msra.mxu0 0.0
    %82 = vmatprep.subr.mxu0 0.0
    %83 = vmatpush1.msra.mxu0 0.0
    %84 = vmatprep.subr.mxu0 0.0
    %85 = vmatpush1.msra.mxu0 0.0
    %86 = vmatprep.subr.mxu0 0.0
    %87 = vmatpush1.msra.mxu0 0.0
    %88 = vmatprep.subr.mxu0 0.0
    %89 = vmatpush1.msra.mxu0 0.0
    %90 = vmatprep.subr.mxu0 0.0
    %91 = vmatpush1.msra.mxu0 0.0
    %92 = vmatprep.subr.mxu0 0.0
    %93 = vmatpush1.msra.mxu0 %v64
    %94 = vmatprep.subr.mxu0 0.0
    %95 = vmatpush1.msra.mxu0 %v49
    %96 = vmatprep.subr.mxu0 0.0
    %97 = vmatpush1.msra.mxu0 %v48
    %98 = vmatprep.subr.mxu0 0.0
    %99 = vmatpush2.msra.mxu0 0.0
    %100 = vmatprep.subr.mxu0 0.0
    %101 = vmatpush2.msra.mxu0 0.0
    %102 = vmatprep.subr.mxu0 0.0
    %103 = vmatpush2.msra.mxu0 0.0
    %104 = vmatprep.subr.mxu0 0.0
    %105 = vmatpush2.msra.mxu0 0.0
    %106 = vmatprep.subr.mxu0 0.0
    %107 = vmatpush2.msra.mxu0 0.0
    %108 = vmatprep.subr.mxu0 0.0
    %109 = vmatpush2.msra.mxu0 0.0
    %110 = vmatprep.subr.mxu0 0.0
    %111 = vmatpush2.msra.mxu0 0.0
    %112 = vmatprep.subr.mxu0 0.0
    %113 = vmatpush2.msra.mxu0 0.0
    %114 = vmatprep.subr.mxu0 0.0
    %115 = vmatpush2.msra.mxu0 0.0
    %116 = vmatprep.subr.mxu0 0.0
    %117 = vmatpush2.msra.mxu0 0.0
    %118 = vmatprep.subr.mxu0 0.0
    %119 = vmatpush2.msra.mxu0 0.0
    %120 = vmatprep.subr.mxu0 0.0
    %121 = vmatpush2.msra.mxu0 0.0
    %122 = vmatprep.subr.mxu0 0.0
    %123 = vmatpush2.msra.mxu0 0.0
    %124 = vmatprep.subr.mxu0 0.0
    %125 = vmatpush2.msra.mxu0 0.0
    %126 = vmatprep.subr.mxu0 0.0
    %127 = vmatpush2.msra.mxu0 0.0
    %128 = vmatprep.subr.mxu0 0.0
    %129 = vmatpush2.msra.mxu0 0.0
    %130 = vmatprep.mubr.f32.mxu0 0.0
    %131 = vmatmul.mubr.f32.gmra.mxu0 %v60
    %v132 = vpop.f32.mrf.mxu0
    %v133 = vadd.f32 %v56, %v132
    %v134 = vpop.f32.mrf.mxu0
    %135 = vdwg.mxu0
    %v136 = vmax.f32 %v133, 0.0
    %v137 = vld [vmem:[%s3] sm:$0x1]
    %v139 = vlaneseq
    %v140 = vshrl.u32 %v139, 7
    %v141 = vsub.s32 0, %v140
    %v142 = vrot.slane %v137, %v141
    %v144 = vmul.f32 %v136, %v142
    %145 = vadd.xlane.f32.xlu0 %v144
    %v146 = vpop.xlane.xlu0 %145
    %s147 = sld [smem:[#allocation2]]
    %v148 = vstv %s147
    %v149 = vadd.f32 %v146, %v148
    %vm150 = vcmask 7168
    %151 = vst.msk [vmem:[%s5] sm:$0xff] %vm150, %v149
    // Predicated region
    $region30: #{tpu_custom_call.1} parent=1 // pred_check
      _
    $region31: #{tpu_custom_call.1} parent=1 // pred_check_branch
      %153 = sbr.rel (0) target = $region33
    $region32: #{tpu_custom_call.1} parent=1 // pred_region
      _
    $region33: #{tpu_custom_call.1} parent=1 // pred_fallthru
      _
    // Predicated region
    $region34: #{tpu_custom_call.1} parent=1 // pred_check
      _
    $region35: #{tpu_custom_call.1} parent=1 // pred_check_branch
      %155 = sbr.rel (0) target = $region37
    $region36: #{tpu_custom_call.1} parent=1 // pred_region
      _
    $region37: #{tpu_custom_call.1} parent=1 // pred_fallthru
      _
    %156 = vsyncpa [#allocation4], 1
    %157 = vsyncpa [#allocation6], 1

</llo_original>
